<compile_context>
chip_gen: v7x
topology: tpu7x:2x2x1
jax: 0.10.0
libtpu: 0.0.40
codegen_flags: <defaults>
</compile_context>

<pallas_src>
import functools

import jax
import jax.numpy as jnp
from jax import lax
from jax.experimental import pallas as pl
from jax.experimental.pallas import tpu as pltpu


# Target tile sizes (f32 working set, double-buffered, stays well under the
# 32 MiB scoped-VMEM default on every generation incl. v7x's 64 MiB physical).
_TM_TARGET = 256   # row tile        (sublane axis, multiple of 8)
_TN_TARGET = 512   # out-column tile (lane axis,    multiple of 128)
_TK_TARGET = 512   # reduction tile  (lane axis,    multiple of 128)


def _pick_tile(dim, target, align):
    """Largest multiple of `align` <= `target` that divides `dim` exactly.

    Falls back to the full extent (always legal) when no aligned divisor
    exists.  Guaranteeing exact division means no partial blocks, so the
    K-reduction never accumulates padding garbage.
    """
    if dim <= target:
        return dim
    t = (target // align) * align
    while t >= align:
        if dim % t == 0:
            return t
        t -= align
    return dim


def _matmul_t_kernel(x_ref, w_ref, o_ref, acc_ref):
    """acc += X_tile @ W_tile.T  (transpose folded into the dot_general)."""
    k = pl.program_id(2)

    @pl.when(k == 0)
    def _():
        acc_ref[...] = jnp.zeros_like(acc_ref)

    acc_ref[...] += lax.dot_general(
        x_ref[...], w_ref[...],
        dimension_numbers=(((1,), (1,)), ((), ())),   # contract x.k with w.k
        preferred_element_type=jnp.float32)

    @pl.when(k == pl.num_programs(2) - 1)
    def _():
        o_ref[...] = acc_ref[...].astype(o_ref.dtype)


def _matmul_t_masked_kernel(x_ref, w_ref, m_ref, o_ref, acc_ref):
    """Same as above, plus Y *= mask applied in f32 on the accumulator."""
    k = pl.program_id(2)

    @pl.when(k == 0)
    def _():
        acc_ref[...] = jnp.zeros_like(acc_ref)

    acc_ref[...] += lax.dot_general(
        x_ref[...], w_ref[...],
        dimension_numbers=(((1,), (1,)), ((), ())),
        preferred_element_type=jnp.float32)

    @pl.when(k == pl.num_programs(2) - 1)
    def _():
        # f32 mask multiply on the accumulator: VPU op hidden under the MXU,
        # and keeps v5e's (non-bf16) VPU on its native path.
        o_ref[...] = (acc_ref[...] *
                      m_ref[...].astype(jnp.float32)).astype(o_ref.dtype)


@functools.partial(jax.jit, static_argnames=("i", "j", "operand_dtype"))
def moebius_forward(X, W, i, j, intervention_mask=None, operand_dtype=None):
    """Pallas implementation of Moebius.forward.

    X:    [n, d] data matrix.
    W:    [d, d] fc.weight in PyTorch convention (y = x @ W.T); passed as-is,
          transpose folded into the kernel.
    i, j: python-int row-slice bounds (j clamped to n; empty slice -> (0, d)).
    intervention_mask: optional [n, d] mask.
    operand_dtype: optional (e.g. jnp.bfloat16) MXU operand dtype; the
          accumulation stays f32.
    """
    n, d_in = X.shape
    d_out = W.shape[0]

    # PyTorch slice semantics: clamp j; degenerate slice -> empty output.
    j = min(j, n)
    i = max(min(i, j), 0)
    rows = j - i
    out_dtype = X.dtype
    if rows <= 0:
        return jnp.zeros((0, d_out), dtype=out_dtype)

    # TODO(synk): i/j stay static args -- the output shape (rows, d) must be
    # static under jit; a scalar-prefetch row offset only avoids recompiles
    # when `rows` is held fixed, so the per-(rows)-count recompile remains.
    x_rows = lax.slice(X, (i, 0), (j, d_in))
    mask_rows = (None if intervention_mask is None
                 else lax.slice(intervention_mask, (i, 0), (j, d_out)))

    if operand_dtype is not None:
        x_rows = x_rows.astype(operand_dtype)
        w = W.astype(operand_dtype)
    else:
        w = W

    tm = _pick_tile(rows, _TM_TARGET, 8)
    tn = _pick_tile(d_out, _TN_TARGET, 128)
    tk = _pick_tile(d_in, _TK_TARGET, 128)
    grid = (rows // tm, d_out // tn, d_in // tk)

    x_spec = pl.BlockSpec((tm, tk), lambda mi, ni, ki: (mi, ki))
    w_spec = pl.BlockSpec((tn, tk), lambda mi, ni, ki: (ni, ki))   # W is [out, in]
    o_spec = pl.BlockSpec((tm, tn), lambda mi, ni, ki: (mi, ni))

    out_shape = jax.ShapeDtypeStruct((rows, d_out), out_dtype)
    scratch = [pltpu.VMEM((tm, tn), jnp.float32)]
    cparams = pltpu.CompilerParams(
        dimension_semantics=("parallel", "parallel", "arbitrary"))

    if mask_rows is not None:
        m_spec = pl.BlockSpec((tm, tn), lambda mi, ni, ki: (mi, ni))
        return pl.pallas_call(
            _matmul_t_masked_kernel,
            out_shape=out_shape,
            grid_spec=pltpu.PrefetchScalarGridSpec(
                num_scalar_prefetch=0,
                grid=grid,
                in_specs=[x_spec, w_spec, m_spec],
                out_specs=o_spec,
                scratch_shapes=scratch),
            compiler_params=cparams,
        )(x_rows, w, mask_rows)

    return pl.pallas_call(
        _matmul_t_kernel,
        out_shape=out_shape,
        grid_spec=pltpu.PrefetchScalarGridSpec(
            num_scalar_prefetch=0,
            grid=grid,
            in_specs=[x_spec, w_spec],
            out_specs=o_spec,
            scratch_shapes=scratch),
        compiler_params=cparams,
    )(x_rows, w)


if __name__ == "__main__":
    key = jax.random.PRNGKey(0)
    k_x, k_w, k_m = jax.random.split(key, 3)

    n, d = 16, 32          # n samples, d variables
    i, j = 2, 64           # j > n on purpose -> clamped to n (reference behavior)

    X = jax.random.normal(k_x, (n, d), dtype=jnp.float32)

    # Deterministic Linear(d, d, bias=False) init: U(-1/sqrt(d), 1/sqrt(d)),
    # matching torch.nn.Linear's default.
    bound = 1.0 / jnp.sqrt(jnp.float32(d))
    W = jax.random.uniform(k_w, (d, d), dtype=jnp.float32,
                           minval=-bound, maxval=bound)

    intervention_mask = (jax.random.uniform(k_m, (n, d)) > 0.5).astype(jnp.float32)

    # Masked path (intervention_mask is not None)
    y_masked = jax.block_until_ready(moebius_forward(X, W, i, j, intervention_mask))
    # Unmasked path
    y_plain = jax.block_until_ready(moebius_forward(X, W, i, j, None))
    # bf16-operand fast path (f32 accumulation) -- looser tolerance.
    y_bf16 = jax.block_until_ready(
        moebius_forward(X, W, i, j, intervention_mask,
                        operand_dtype=jnp.bfloat16))
    # Degenerate slice matches PyTorch's empty-slice behavior.
    y_empty = jax.block_until_ready(moebius_forward(X, W, 10, 5, None))

    # Pure-JAX reference check.
    jj = min(j, n)
    ref_plain = X[i:jj, :] @ W.T
    ref_masked = ref_plain * intervention_mask[i:jj, :]
    assert y_plain.shape == (jj - i, d)
    assert y_empty.shape == (0, d)
    assert jnp.allclose(y_plain, ref_plain, atol=1e-5, rtol=1e-5)
    assert jnp.allclose(y_masked, ref_masked, atol=1e-5, rtol=1e-5)
    assert jnp.allclose(y_bf16, ref_masked, atol=1e-1, rtol=5e-2)

    print("KERNEL_OK")
</pallas_src>

<mosaic_0001>
module attributes {stable_mosaic.version = 11 : i64} {
  func.func @_matmul_t_masked_kernel(%arg0: i32, %arg1: i32, %arg2: i32, %arg3: memref<14x32xf32, #tpu.memory_space<vmem>>, %arg4: memref<32x32xf32, #tpu.memory_space<vmem>>, %arg5: memref<14x32xf32, #tpu.memory_space<vmem>>, %arg6: memref<14x32xf32, #tpu.memory_space<vmem>>, %arg7: memref<14x32xf32, #tpu.memory_space<vmem>>) attributes {dimension_semantics = [#tpu.dimension_semantics<parallel>, #tpu.dimension_semantics<parallel>, #tpu.dimension_semantics<arbitrary>], iteration_bounds = array<i64: 1, 1, 1>, scalar_prefetch = 0 : i64, scratch_operands = 1 : i64, tpu.core_type = #tpu.core_type<tc>, window_params = [{transform_indices = @transform_0, window_bounds = array<i64: 14, 32>}, {transform_indices = @transform_1, window_bounds = array<i64: 32, 32>}, {transform_indices = @transform_2, window_bounds = array<i64: 14, 32>}, {transform_indices = @transform_3, window_bounds = array<i64: 14, 32>}]} {
    %c0_i32 = arith.constant 0 : i32
    %0 = arith.cmpi eq, %arg2, %c0_i32 : i32
    %1 = arith.extui %0 : i1 to i32
    %c0_i32_0 = arith.constant 0 : i32
    %2 = arith.cmpi ne, %1, %c0_i32_0 : i32
    scf.if %2 {
      %cst_10 = arith.constant 0.000000e+00 : f32
      %12 = vector.broadcast %cst_10 : f32 to vector<14x32xf32>
      %c0_11 = arith.constant 0 : index
      %c0_12 = arith.constant 0 : index
      %13 = vector.load %arg7[%c0_11, %c0_12] : memref<14x32xf32, #tpu.memory_space<vmem>>, vector<14x32xf32>
      tpu.vector_store %arg7[%c0_11, %c0_12], %12 {strides = array<i32>} : memref<14x32xf32, #tpu.memory_space<vmem>>, vector<14x32xf32>,
    } else {
    }
    %c0 = arith.constant 0 : index
    %c0_1 = arith.constant 0 : index
    %3 = vector.load %arg7[%c0, %c0_1] : memref<14x32xf32, #tpu.memory_space<vmem>>, vector<14x32xf32>
    %c0_2 = arith.constant 0 : index
    %c0_3 = arith.constant 0 : index
    %4 = vector.load %arg3[%c0_2, %c0_3] : memref<14x32xf32, #tpu.memory_space<vmem>>, vector<14x32xf32>
    %c0_4 = arith.constant 0 : index
    %c0_5 = arith.constant 0 : index
    %5 = vector.load %arg4[%c0_4, %c0_5] : memref<32x32xf32, #tpu.memory_space<vmem>>, vector<32x32xf32>
    %cst = arith.constant dense<0.000000e+00> : vector<14x32xf32>
    %6 = tpu.matmul %4, %5, %cst {dimension_numbers = #tpu.dot_dimension_numbers<[1], [1], [0], [0], [0, 0, 1, 0], [], []>} : vector<14x32xf32>, vector<32x32xf32>, vector<14x32xf32> -> vector<14x32xf32>
    %7 = arith.addf %3, %6 : vector<14x32xf32>
    %c0_6 = arith.constant 0 : index
    %c0_7 = arith.constant 0 : index
    %8 = vector.load %arg7[%c0_6, %c0_7] : memref<14x32xf32, #tpu.memory_space<vmem>>, vector<14x32xf32>
    tpu.vector_store %arg7[%c0_6, %c0_7], %7 {strides = array<i32>} : memref<14x32xf32, #tpu.memory_space<vmem>>, vector<14x32xf32>,
    %c0_i32_8 = arith.constant 0 : i32
    %9 = arith.cmpi eq, %arg2, %c0_i32_8 : i32
    %10 = arith.extui %9 : i1 to i32
    %c0_i32_9 = arith.constant 0 : i32
    %11 = arith.cmpi ne, %10, %c0_i32_9 : i32
    scf.if %11 {
      %c0_10 = arith.constant 0 : index
      %c0_11 = arith.constant 0 : index
      %12 = vector.load %arg7[%c0_10, %c0_11] : memref<14x32xf32, #tpu.memory_space<vmem>>, vector<14x32xf32>
      %c0_12 = arith.constant 0 : index
      %c0_13 = arith.constant 0 : index
      %13 = vector.load %arg5[%c0_12, %c0_13] : memref<14x32xf32, #tpu.memory_space<vmem>>, vector<14x32xf32>
      %14 = arith.mulf %12, %13 : vector<14x32xf32>
      %c0_14 = arith.constant 0 : index
      %c0_15 = arith.constant 0 : index
      %15 = vector.load %arg6[%c0_14, %c0_15] : memref<14x32xf32, #tpu.memory_space<vmem>>, vector<14x32xf32>
      tpu.vector_store %arg6[%c0_14, %c0_15], %14 {strides = array<i32>} : memref<14x32xf32, #tpu.memory_space<vmem>>, vector<14x32xf32>,
    } else {
    }
    return
  }
  func.func @transform_0(%arg0: i32, %arg1: i32, %arg2: i32) -> (i32, i32) {
    %c0_i32 = arith.constant 0 : i32
    return %arg0, %arg2 : i32, i32
  }
  func.func @transform_1(%arg0: i32, %arg1: i32, %arg2: i32) -> (i32, i32) {
    %c0_i32 = arith.constant 0 : i32
    return %arg1, %arg2 : i32, i32
  }
  func.func @transform_2(%arg0: i32, %arg1: i32, %arg2: i32) -> (i32, i32) {
    %c0_i32 = arith.constant 0 : i32
    return %arg0, %arg1 : i32, i32
  }
  func.func @transform_3(%arg0: i32, %arg1: i32, %arg2: i32) -> (i32, i32) {
    %c0_i32 = arith.constant 0 : i32
    return %arg0, %arg1 : i32, i32
  }
}

</mosaic_0001>

<llo_original>
// kernel: moebius_forward.1
$region0: #{moebius_forward.1}
  #allocation0 [shape = 'u32[]', space=smem, size = 0x4, offset = 0x4, fixed_abs, tag = 'smem constant byte address 0x4 - core index']
  #allocation1 [shape = 'u32[144,128]{1,0:T(1,128)}', space=vmem, size = 0x12000, scoped, tag = 'internal scratch']
  #allocation2 [shape = 'f32[14,32]{1,0:T(8,128)}', space=vmem, size = 0x2000, scoped, tag = 'scratch operand']
  %s0 = inlined_call_operand.vmem [shape: f32[14,32], index: 0, kind: input, shape index: {}]
  %s1 = inlined_call_operand.vmem [shape: f32[32,32], index: 1, kind: input, shape index: {}]
  %s2 = inlined_call_operand.vmem [shape: f32[14,32], index: 2, kind: input, shape index: {}]
  %s3 = inlined_call_operand.hbm [shape: f32[14,32], index: 3, kind: output, shape index: {}]
  %s4 = sld [smem:[#allocation0]]
  $region30: #{moebius_forward.1} parent=0
    _
  %s6 = ssub.s32 1, %s4
  %s7 = scalar_select 0, %s6, %s4
  $region1: #{moebius_forward.1} parent=0
    #allocation3 [shape = 'u8[8192]{0}', space=vmem, size = 0x2000, scoped, tag = 'output window, operand 0, single buffered']
    #allocation4 [shape = 's32[1]{0}', space=sflag, size = 0x4, scoped, tag = 'scoped memory for moebius_forward.1']
    %8 = vsyncpa [#allocation4], 0
    // Predicated region
    $region2: #{moebius_forward.1} parent=1 // pred_check
      _
    $region3: #{moebius_forward.1} parent=1 // pred_check_branch
      %10 = sbr.rel (0) target = $region5
    $region4: #{moebius_forward.1} parent=1 // pred_region
      _
    $region5: #{moebius_forward.1} parent=1 // pred_fallthru
      _
    // Predicated region
    $region6: #{moebius_forward.1} parent=1 // pred_check
      _
    $region7: #{moebius_forward.1} parent=1 // pred_check_branch
      %12 = sbr.rel (0) target = $region9
    $region8: #{moebius_forward.1} parent=1 // pred_region
      _
    $region9: #{moebius_forward.1} parent=1 // pred_fallthru
      _
    // Predicated region
    $region10: #{moebius_forward.1} parent=1 // pred_check
      _
    $region11: #{moebius_forward.1} parent=1 // pred_check_branch
      %14 = sbr.rel (0) target = $region13
    $region12: #{moebius_forward.1} parent=1 // pred_region
      _
    $region13: #{moebius_forward.1} parent=1 // pred_fallthru
      _
    %p15 = scmp.eq.s32.totalorder 0, 0
    // Predicated region
    $region14: #{moebius_forward.1} parent=1 // pred_check
      %p16 = pneg %p15
    $region15: #{moebius_forward.1} parent=1 // pred_check_branch
      %18 = sbr.rel (%p16) target = $region17
    $region16: #{moebius_forward.1} parent=1 // pred_region
      %vm19 = vcmask 261120
      %20 = vst.msk [vmem:[#allocation2] sm:$0xff] %vm19, 0.0
      %vm21 = vcmask 259072
      %22 = vst.msk [vmem:[#allocation2 + $0x8] sm:$0x3f] %vm21, 0.0
    $region17: #{moebius_forward.1} parent=1 // pred_fallthru
      _
    %v23 = vld [vmem:[#allocation2] sm:$0xff]
    %v24 = vld [vmem:[#allocation2 + $0x8] sm:$0x3f]
    %v25 = vld [vmem:[%s0] sm:$0xff]
    %v26 = vld [vmem:[%s0 + $0x8] sm:$0x3f]
    %v27 = vld [vmem:[%s1] sm:$0xff]
    %v28 = vld [vmem:[%s1 + $0x8] sm:$0xff]
    %v29 = vld [vmem:[%s1 + $0x10] sm:$0xff]
    %v30 = vld [vmem:[%s1 + $0x18] sm:$0xff]
    %vm31 = vcmask 261120
    %v33 = vsel %vm31, %v25, 0
    %v36 = vsel %vm31, %v26, 0
    %v39 = vsel %vm31, %v27, 0
    %v42 = vsel %vm31, %v28, 0
    %v45 = vsel %vm31, %v29, 0
    %v48 = vsel %vm31, %v30, 0
    %50 = vmatprep.subr.mxu0 0.0
    %51 = vmatpush1.xpose.msra.mxu0 %v39
    %52 = vmatprep.subr.mxu0 0.0
    %53 = vmatpush1.xpose.msra.mxu0 %v42
    %54 = vmatprep.subr.mxu0 0.0
    %55 = vmatpush1.xpose.msra.mxu0 %v45
    %56 = vmatprep.subr.mxu0 0.0
    %57 = vmatpush1.xpose.msra.mxu0 %v48
    %58 = vmatprep.subr.mxu0 0.0
    %59 = vmatpush1.xpose.msra.mxu0 0.0
    %60 = vmatprep.subr.mxu0 0.0
    %61 = vmatpush1.xpose.msra.mxu0 0.0
    %62 = vmatprep.subr.mxu0 0.0
    %63 = vmatpush1.xpose.msra.mxu0 0.0
    %64 = vmatprep.subr.mxu0 0.0
    %65 = vmatpush1.xpose.msra.mxu0 0.0
    %66 = vmatprep.subr.mxu0 0.0
    %67 = vmatpush1.xpose.msra.mxu0 0.0
    %68 = vmatprep.subr.mxu0 0.0
    %69 = vmatpush1.xpose.msra.mxu0 0.0
    %70 = vmatprep.subr.mxu0 0.0
    %71 = vmatpush1.xpose.msra.mxu0 0.0
    %72 = vmatprep.subr.mxu0 0.0
    %73 = vmatpush1.xpose.msra.mxu0 0.0
    %74 = vmatprep.subr.mxu0 0.0
    %75 = vmatpush1.xpose.msra.mxu0 0.0
    %76 = vmatprep.subr.mxu0 0.0
    %77 = vmatpush1.xpose.msra.mxu0 0.0
    %78 = vmatprep.subr.mxu0 0.0
    %79 = vmatpush1.xpose.msra.mxu0 0.0
    %80 = vmatprep.subr.mxu0 0.0
    %81 = vmatpush1.xpose.msra.mxu0 0.0
    %82 = vmatprep.subr.mxu0 0.0
    %83 = vmatpush1.xpose.msra.mxu0 0.0
    %84 = vmatprep.subr.mxu0 0.0
    %85 = vmatpush1.xpose.msra.mxu0 0.0
    %86 = vmatprep.subr.mxu0 0.0
    %87 = vmatpush1.xpose.msra.mxu0 0.0
    %88 = vmatprep.subr.mxu0 0.0
    %89 = vmatpush1.xpose.msra.mxu0 0.0
    %90 = vmatprep.subr.mxu0 0.0
    %91 = vmatpush1.xpose.msra.mxu0 0.0
    %92 = vmatprep.subr.mxu0 0.0
    %93 = vmatpush1.xpose.msra.mxu0 0.0
    %94 = vmatprep.subr.mxu0 0.0
    %95 = vmatpush1.xpose.msra.mxu0 0.0
    %96 = vmatprep.subr.mxu0 0.0
    %97 = vmatpush1.xpose.msra.mxu0 0.0
    %98 = vmatprep.subr.mxu0 0.0
    %99 = vmatpush1.xpose.msra.mxu0 0.0
    %100 = vmatprep.subr.mxu0 0.0
    %101 = vmatpush1.xpose.msra.mxu0 0.0
    %102 = vmatprep.subr.mxu0 0.0
    %103 = vmatpush1.xpose.msra.mxu0 0.0
    %104 = vmatprep.subr.mxu0 0.0
    %105 = vmatpush1.xpose.msra.mxu0 0.0
    %106 = vmatprep.subr.mxu0 0.0
    %107 = vmatpush1.xpose.msra.mxu0 0.0
    %108 = vmatprep.subr.mxu0 0.0
    %109 = vmatpush1.xpose.msra.mxu0 0.0
    %110 = vmatprep.subr.mxu0 0.0
    %111 = vmatpush1.xpose.msra.mxu0 0.0
    %112 = vmatprep.subr.mxu0 0.0
    %113 = vmatpush1.xpose.msra.mxu0 0.0
    %114 = vmatprep.mubr.f32.mxu0 0.0
    %115 = vmatmul.mubr.f32.gmra.mrb[0].mxu0 %v33
    %v116 = vpop.f32.mrb[0].mxu0
    %v117 = vadd.f32 0.0, %v116
    %v118 = vpop.f32.mrb[0].mxu0
    %119 = vmatprep.mubr.f32.mxu0 0.0
    %120 = vmatmul.mubr.f32.gmra.mrb[0].mxu0 %v36
    %v121 = vpop.f32.mrb[0].mxu0
    %v122 = vadd.f32 0.0, %v121
    %v123 = vpop.f32.mrb[0].mxu0
    %124 = vdwg.mxu0
    %v125 = vadd.f32 %v23, %v117
    %v126 = vadd.f32 %v24, %v122
    %127 = vst.msk [vmem:[#allocation2] sm:$0xff] %vm31, %v125
    %vm128 = vcmask 259072
    %129 = vst.msk [vmem:[#allocation2 + $0x8] sm:$0x3f] %vm128, %v126
    // Predicated region
    $region18: #{moebius_forward.1} parent=1 // pred_check
      %p130 = pneg %p15
    $region19: #{moebius_forward.1} parent=1 // pred_check_branch
      %132 = sbr.rel (%p130) target = $region21
    $region20: #{moebius_forward.1} parent=1 // pred_region
      %v133 = vld [vmem:[#allocation2] sm:$0xff]
      %v134 = vld [vmem:[#allocation2 + $0x8] sm:$0x3f]
      %v135 = vld [vmem:[%s2] sm:$0xff]
      %v136 = vld [vmem:[%s2 + $0x8] sm:$0x3f]
      %v137 = vmul.f32 %v133, %v135
      %v138 = vmul.f32 %v134, %v136
      %139 = vst.msk [vmem:[#allocation3] sm:$0xff] %vm31, %v137
      %140 = vst.msk [vmem:[#allocation3 + $0x8] sm:$0x3f] %vm128, %v138
    $region21: #{moebius_forward.1} parent=1 // pred_fallthru
      _
    // Predicated region
    $region22: #{moebius_forward.1} parent=1 // pred_check
      _
    $region23: #{moebius_forward.1} parent=1 // pred_check_branch
      %142 = sbr.rel (0) target = $region25
    $region24: #{moebius_forward.1} parent=1 // pred_region
      %s144 = ssub.s32 256, 256
      %145 = vsyncadd [#allocation4], %s144
      %s146 = sshll.u32 [#allocation3], 4
      %s147 = int_to_ptr.vmem [resolvable:$true] %s146
      %152 = dma.vmem_to_hbm [thread:$0]  %s147, 256, %s3, [#allocation4], 128, 128, 8
    $region25: #{moebius_forward.1} parent=1 // pred_fallthru
      _
    // Predicated region
    $region26: #{moebius_forward.1} parent=1 // pred_check
      _
    $region27: #{moebius_forward.1} parent=1 // pred_check_branch
      %154 = sbr.rel (0) target = $region29
    $region28: #{moebius_forward.1} parent=1 // pred_region
      %155 = dma.done [#allocation4], 256
    $region29: #{moebius_forward.1} parent=1 // pred_fallthru
      _
    %156 = vsyncpa [#allocation4], 1

</llo_original>
